<compile_context>
chip_gen: v6e
topology: v6e:2x2x1
jax: 0.10.0
libtpu: 0.0.40
codegen_flags: <defaults>
</compile_context>

<pallas_src>
import functools

import jax
import jax.numpy as jnp
from jax.experimental import pallas as pl
from jax.experimental.pallas import tpu as pltpu

_NEG = -1e30


# ------------------------------------------------------------------ helpers --

def _default_vmem_limit():
    # v7x has only 64 MiB VMEM per TensorCore -> leave headroom for compiler
    # scratch; v5e/v6e (128 MiB) can afford a larger scoped limit.
    try:
        cap = pltpu.get_tpu_info().vmem_capacity_bytes
        return 40 * 1024 * 1024 if cap <= 64 * 1024 * 1024 else 64 * 1024 * 1024
    except Exception:
        return 48 * 1024 * 1024


_VMEM_LIMIT = _default_vmem_limit()


def _ru(x, m):
    return ((x + m - 1) // m) * m


def _pad2(a, rows, cols, val=0):
    r, c = a.shape
    if r == rows and c == cols:
        return a
    return jnp.pad(a, ((0, rows - r), (0, cols - c)), constant_values=val)


def _cparams(dims):
    return pltpu.CompilerParams(dimension_semantics=dims,
                                vmem_limit_bytes=_VMEM_LIMIT)


# ------------------------------------------------------- LayerNorm (apply) --

def _ln_kernel(x_ref, g_ref, b_ref, o_ref, *, d_valid, eps):
    x = x_ref[...].astype(jnp.float32)               # (tm, Kp), zero-padded cols
    inv_d = 1.0 / d_valid
    s1 = jnp.sum(x, axis=-1, keepdims=True)
    s2 = jnp.sum(x * x, axis=-1, keepdims=True)
    mu = s1 * inv_d
    var = jnp.maximum(s2 * inv_d - mu * mu, 0.0)
    rstd = jax.lax.rsqrt(var + eps)
    # gamma/beta are zero-padded, so padded columns of the output stay zero.
    o_ref[...] = ((x - mu) * rstd * g_ref[...] + b_ref[...]).astype(o_ref.dtype)


def pl_layernorm(x, gamma, beta, eps=1e-5, out_dtype=jnp.bfloat16, tm=512):
    M, K = x.shape
    tm = min(tm, _ru(M, 8))
    Mp, Kp = _ru(M, tm), _ru(K, 128)
    xp = _pad2(x, Mp, Kp)
    gp = _pad2(gamma.reshape(1, K).astype(jnp.float32), 1, Kp)
    bp = _pad2(beta.reshape(1, K).astype(jnp.float32), 1, Kp)
    out = pl.pallas_call(
        functools.partial(_ln_kernel, d_valid=K, eps=eps),
        grid=(Mp // tm,),
        in_specs=[pl.BlockSpec((tm, Kp), lambda i: (i, 0)),
                  pl.BlockSpec((1, Kp), lambda i: (0, 0)),
                  pl.BlockSpec((1, Kp), lambda i: (0, 0))],
        out_specs=pl.BlockSpec((tm, Kp), lambda i: (i, 0)),
        out_shape=jax.ShapeDtypeStruct((Mp, Kp), out_dtype),
        compiler_params=_cparams(("parallel",)),
    )(xp, gp, bp)
    return out[:M, :K]


# --------------------------------------------------------- tiled linear ----

def _linear_kernel(x_ref, w_ref, b_ref, o_ref, acc_ref, *, act, nk):
    k = pl.program_id(2)

    @pl.when(k == 0)
    def _zero():
        acc_ref[...] = jnp.zeros_like(acc_ref)

    acc_ref[...] += jnp.dot(x_ref[...], w_ref[...],
                            preferred_element_type=jnp.float32)

    @pl.when(k == nk - 1)
    def _fin():
        y = acc_ref[...] + b_ref[...]
        if act == "gelu":
            y = jax.nn.gelu(y, approximate=True)
        o_ref[...] = y.astype(o_ref.dtype)


def pl_linear(x, w, b, act=None, out_dtype=jnp.float32, tm=512, tn=512, tk=512):
    M, K = x.shape
    N = w.shape[1]
    tm = min(tm, _ru(M, 8))
    tk = min(tk, _ru(K, 128))
    tn = min(tn, _ru(N, 128))
    Mp, Kp, Np = _ru(M, tm), _ru(K, tk), _ru(N, tn)
    nk = Kp // tk

    xp = _pad2(x, Mp, Kp).astype(jnp.bfloat16)
    wp = _pad2(w, Kp, Np).astype(jnp.bfloat16)
    bp = _pad2(b.reshape(1, N).astype(jnp.float32), 1, Np)

    out = pl.pallas_call(
        functools.partial(_linear_kernel, act=act, nk=nk),
        grid=(Mp // tm, Np // tn, nk),
        in_specs=[pl.BlockSpec((tm, tk), lambda i, j, k: (i, k)),
                  pl.BlockSpec((tk, tn), lambda i, j, k: (k, j)),
                  pl.BlockSpec((1, tn), lambda i, j, k: (0, j))],
        out_specs=pl.BlockSpec((tm, tn), lambda i, j, k: (i, j)),
        out_shape=jax.ShapeDtypeStruct((Mp, Np), out_dtype),
        scratch_shapes=[pltpu.VMEM((tm, tn), jnp.float32)],
        compiler_params=_cparams(("parallel", "parallel", "arbitrary")),
    )(xp, wp, bp)
    return out[:M, :N]


# ------------------------------------------------- flash causal attention ---

def _attn_kernel(q_ref, k_ref, v_ref, o_ref, m_sc, l_sc, acc_sc,
                 *, scale, t_valid, tq, tkv, nkv):
    qi = pl.program_id(1)
    ki = pl.program_id(2)

    @pl.when(ki == 0)
    def _init():
        m_sc[...] = jnp.full(m_sc.shape, _NEG, jnp.float32)
        l_sc[...] = jnp.zeros_like(l_sc)
        acc_sc[...] = jnp.zeros_like(acc_sc)

    # kv blocks entirely above the causal diagonal are skipped (their DMA is
    # also elided because the kv index_map clamps the block index to qi).
    @pl.when(ki * tkv <= qi * tq + tq - 1)
    def _compute():
        q = q_ref[0]                                     # (tq, hd) bf16
        kk = k_ref[0]                                    # (tkv, hd) bf16
        s = jax.lax.dot_general(q, kk, (((1,), (1,)), ((), ())),
                                preferred_element_type=jnp.float32) * scale
        row = jax.lax.broadcasted_iota(jnp.int32, s.shape, 0) + qi * tq
        col = jax.lax.broadcasted_iota(jnp.int32, s.shape, 1) + ki * tkv
        s = jnp.where((col <= row) & (col < t_valid), s, _NEG)

        m_prev = m_sc[...]
        m_new = jnp.maximum(m_prev, jnp.max(s, axis=-1, keepdims=True))
        alpha = jnp.exp(m_prev - m_new)
        p = jnp.exp(s - m_new)
        l_sc[...] = alpha * l_sc[...] + jnp.sum(p, axis=-1, keepdims=True)
        acc_sc[...] = alpha * acc_sc[...] + jnp.dot(
            p.astype(jnp.bfloat16), v_ref[0], preferred_element_type=jnp.float32)
        m_sc[...] = m_new

    @pl.when(ki == nkv - 1)
    def _store():
        o_ref[0] = (acc_sc[...] *
                    pl.reciprocal(l_sc[...], approx=True)).astype(o_ref.dtype)


def pl_causal_attention(q, k, v, out_dtype=jnp.bfloat16):
    BH, T, hd = q.shape
    scale = 1.0 / (hd ** 0.5)
    tq = min(256, _ru(T, 8))
    Tp = _ru(T, tq)
    nblk = Tp // tq

    def pad3(a):
        return jnp.pad(a, ((0, 0), (0, Tp - T), (0, 0))).astype(jnp.bfloat16)

    qp, kp, vp = pad3(q), pad3(k), pad3(v)
    q_spec = pl.BlockSpec((1, tq, hd), lambda b, i, j: (b, i, 0))
    # Clamp the kv block index to the causal range: j > i re-references the
    # resident block so no DMA is issued for fully-masked kv tiles.
    kv_spec = pl.BlockSpec((1, tq, hd), lambda b, i, j: (b, jnp.minimum(j, i), 0))

    out = pl.pallas_call(
        functools.partial(_attn_kernel, scale=scale, t_valid=T,
                          tq=tq, tkv=tq, nkv=nblk),
        grid=(BH, nblk, nblk),
        in_specs=[q_spec, kv_spec, kv_spec],
        out_specs=q_spec,
        out_shape=jax.ShapeDtypeStruct((BH, Tp, hd), out_dtype),
        scratch_shapes=[pltpu.VMEM((tq, 1), jnp.float32),
                        pltpu.VMEM((tq, 1), jnp.float32),
                        pltpu.VMEM((tq, hd), jnp.float32)],
        compiler_params=_cparams(("parallel", "parallel", "arbitrary")),
    )(qp, kp, vp)
    return out[:, :T, :]


# --------------------------------------------------- VQ codebook argmin -----

def _codebook_kernel(z_ref, et_ref, esq_ref, o_ref):
    z = z_ref[...]                                           # (tn, Dp) bf16
    et = et_ref[...]                                         # (Dp, Kp) bf16
    dots = jnp.dot(z, et, preferred_element_type=jnp.float32)
    # ||z||^2 is constant per row -> irrelevant for the argmin.
    d = esq_ref[...] - 2.0 * dots                            # (tn, Kp)
    ids = jax.lax.broadcasted_iota(jnp.int32, d.shape, 1)
    mind = jnp.min(d, axis=-1, keepdims=True)
    idx = jnp.min(jnp.where(d <= mind, ids, jnp.int32(2 ** 30)),
                  axis=-1, keepdims=True)                    # (tn, 1)
    o_ref[...] = idx


def pl_codebook_indices(z, codebook_t, codebook_sq, tn=512):
    N, D = z.shape
    K = codebook_sq.shape[0]
    tn = min(tn, _ru(N, 8))
    Np = _ru(N, tn)
    Dp = _ru(D, 128)
    Kp = _ru(K, 128)
    zp = _pad2(z, Np, Dp).astype(jnp.bfloat16)
    etp = _pad2(codebook_t, Dp, Kp).astype(jnp.bfloat16)
    esq = jnp.pad(codebook_sq.astype(jnp.float32), (0, Kp - K),
                  constant_values=1e30).reshape(1, Kp)
    out = pl.pallas_call(
        _codebook_kernel,
        grid=(Np // tn,),
        in_specs=[pl.BlockSpec((tn, Dp), lambda i: (i, 0)),
                  pl.BlockSpec((Dp, Kp), lambda i: (0, 0)),
                  pl.BlockSpec((1, Kp), lambda i: (0, 0))],
        out_specs=pl.BlockSpec((tn, 1), lambda i: (i, 0)),
        out_shape=jax.ShapeDtypeStruct((Np, 1), jnp.int32),
        compiler_params=_cparams(("parallel",)),
    )(zp, etp, esq)
    return out[:N, 0]


# -------------------------------------- fused LM head + cross-entropy -------

def _head_ce_kernel(x_ref, w_ref, b_ref, tgt_ref, logits_ref, loss_ref,
                    acc_ref, m_ref, l_ref, tl_ref, *, nk, nj, tn, v_valid):
    j = pl.program_id(1)
    k = pl.program_id(2)

    @pl.when(k == 0)
    def _zero():
        acc_ref[...] = jnp.zeros_like(acc_ref)

    acc_ref[...] += jnp.dot(x_ref[...], w_ref[...],
                            preferred_element_type=jnp.float32)

    @pl.when(k == nk - 1)
    def _finish():
        @pl.when(j == 0)
        def _reset():
            m_ref[...] = jnp.full(m_ref.shape, _NEG, jnp.float32)
            l_ref[...] = jnp.zeros_like(l_ref)
            tl_ref[...] = jnp.zeros_like(tl_ref)

        logits = acc_ref[...] + b_ref[...]                 # (tm, tn) f32
        logits_ref[...] = logits.astype(logits_ref.dtype)  # bf16 store

        col = jax.lax.broadcasted_iota(jnp.int32, logits.shape, 1) + j * tn
        lmask = jnp.where(col < v_valid, logits, _NEG)
        tgt = tgt_ref[...]                                 # (tm, 1) int32
        t_hit = jnp.sum(jnp.where(col == tgt, logits, 0.0),
                        axis=-1, keepdims=True)

        m_prev = m_ref[...]
        m_new = jnp.maximum(m_prev, jnp.max(lmask, axis=-1, keepdims=True))
        l_ref[...] = (l_ref[...] * jnp.exp(m_prev - m_new) +
                      jnp.sum(jnp.exp(lmask - m_new), axis=-1, keepdims=True))
        m_ref[...] = m_new
        tl_ref[...] = tl_ref[...] + t_hit

        @pl.when(j == nj - 1)
        def _emit_loss():
            loss_ref[...] = (m_ref[...] + jnp.log(l_ref[...])) - tl_ref[...]


def pl_head_ce(x, w, b, targets, tm=512, tn=512, tk=512,
               logits_dtype=jnp.bfloat16):
    """x must already be LayerNorm-ed (bf16).  Returns (logits, per-row CE)."""
    M, K = x.shape
    V = w.shape[1]
    tm = min(tm, _ru(M, 8))
    tk = min(tk, _ru(K, 128))
    tn = min(tn, _ru(V, 128))
    Mp, Kp, Np = _ru(M, tm), _ru(K, tk), _ru(V, tn)
    nk, nj = Kp // tk, Np // tn

    xp = _pad2(x, Mp, Kp).astype(jnp.bfloat16)
    wp = _pad2(w, Kp, Np).astype(jnp.bfloat16)
    bp = _pad2(b.reshape(1, V).astype(jnp.float32), 1, Np)
    tp = jnp.pad(targets.astype(jnp.int32), (0, Mp - M)).reshape(Mp, 1)

    logits, loss = pl.pallas_call(
        functools.partial(_head_ce_kernel, nk=nk, nj=nj, tn=tn, v_valid=V),
        grid=(Mp // tm, nj, nk),
        in_specs=[pl.BlockSpec((tm, tk), lambda i, j, k: (i, k)),
                  pl.BlockSpec((tk, tn), lambda i, j, k: (k, j)),
                  pl.BlockSpec((1, tn), lambda i, j, k: (0, j)),
                  pl.BlockSpec((tm, 1), lambda i, j, k: (i, 0))],
        out_specs=[pl.BlockSpec((tm, tn), lambda i, j, k: (i, j)),
                   pl.BlockSpec((tm, 1), lambda i, j, k: (i, 0))],
        out_shape=[jax.ShapeDtypeStruct((Mp, Np), logits_dtype),
                   jax.ShapeDtypeStruct((Mp, 1), jnp.float32)],
        scratch_shapes=[pltpu.VMEM((tm, tn), jnp.float32),
                        pltpu.VMEM((tm, 1), jnp.float32),
                        pltpu.VMEM((tm, 1), jnp.float32),
                        pltpu.VMEM((tm, 1), jnp.float32)],
        compiler_params=_cparams(("parallel", "arbitrary", "arbitrary")),
    )(xp, wp, bp, tp)
    return logits[:M, :V], loss[:M, 0]


# ------------------------------------------------------------------- params --

def init_dalle_params(key, *, in_channels, patch, codebook_dim, image_vocab_size,
                      num_words, max_text_len, image_size, n_embd, n_layers):
    T = max_text_len + image_size * image_size
    V = num_words + image_vocab_size
    keys = iter(jax.random.split(key, 64))

    def nrm(shape, scale=0.02, dtype=jnp.float32):
        return (scale * jax.random.normal(next(keys), shape, jnp.float32)).astype(dtype)

    codebook = nrm((image_vocab_size, codebook_dim), 0.1)
    vae = dict(
        enc_w=nrm((in_channels * patch * patch, codebook_dim), 0.1, jnp.bfloat16),
        enc_b=jnp.zeros((codebook_dim,), jnp.float32),
        codebook_t=codebook.T.astype(jnp.bfloat16),            # (D, K) pre-transposed
        codebook_sq=jnp.sum(codebook * codebook, axis=-1),      # (K,) ||e||^2
    )
    blocks = []
    for _ in range(n_layers):
        blocks.append(dict(
            ln1_g=jnp.ones((n_embd,), jnp.float32), ln1_b=jnp.zeros((n_embd,), jnp.float32),
            w_qkv=nrm((n_embd, 3 * n_embd), dtype=jnp.bfloat16),
            b_qkv=jnp.zeros((3 * n_embd,), jnp.float32),
            w_proj=nrm((n_embd, n_embd), dtype=jnp.bfloat16),
            b_proj=jnp.zeros((n_embd,), jnp.float32),
            ln2_g=jnp.ones((n_embd,), jnp.float32), ln2_b=jnp.zeros((n_embd,), jnp.float32),
            w_fc=nrm((n_embd, 4 * n_embd), dtype=jnp.bfloat16),
            b_fc=jnp.zeros((4 * n_embd,), jnp.float32),
            w_mlp_proj=nrm((4 * n_embd, n_embd), dtype=jnp.bfloat16),
            b_mlp_proj=jnp.zeros((n_embd,), jnp.float32),
        ))
    gpt = dict(
        text_tok_emb=nrm((num_words, n_embd)),
        image_tok_emb=nrm((image_vocab_size, n_embd)),
        pos_emb=nrm((T, n_embd)),
        blocks=blocks,
        lnf_g=jnp.ones((n_embd,), jnp.float32), lnf_b=jnp.zeros((n_embd,), jnp.float32),
        head_w=nrm((n_embd, V), dtype=jnp.bfloat16),
        head_b=jnp.zeros((V,), jnp.float32),
    )
    return dict(vae=vae, gpt=gpt)


# ------------------------------------------------------------------ forward --

def vae_get_codebook_indices(vparams, im, patch):
    """VQ encoder: patch-embed (as matmul) + nearest-codebook argmin."""
    B, C, H, W = im.shape
    gh, gw = H // patch, W // patch
    x = im.reshape(B, C, gh, patch, gw, patch)
    x = x.transpose(0, 2, 4, 1, 3, 5).reshape(B * gh * gw, C * patch * patch)
    z = pl_linear(x, vparams["enc_w"], vparams["enc_b"], out_dtype=jnp.bfloat16)
    idx = pl_codebook_indices(z, vparams["codebook_t"], vparams["codebook_sq"])
    return idx.reshape(B, gh * gw)


def gpt_forward(gparams, image_tokens, text_tokens, targets, *, n_heads):
    B, Lt = text_tokens.shape
    Li = image_tokens.shape[1]
    T = Lt + Li
    E = gparams["pos_emb"].shape[1]
    hd = E // n_heads

    text_emb = jnp.take(gparams["text_tok_emb"], text_tokens, axis=0)
    image_emb = jnp.take(gparams["image_tok_emb"], image_tokens, axis=0)
    x = jnp.concatenate([text_emb, image_emb], axis=1) + gparams["pos_emb"][None, :T]
    x = x.reshape(B * T, E)                                   # f32 residual stream

    for blk in gparams["blocks"]:
        # LN1 applied once (bf16), then the QKV projection streams bf16.
        xn = pl_layernorm(x, blk["ln1_g"], blk["ln1_b"])
        qkv = pl_linear(xn, blk["w_qkv"], blk["b_qkv"], out_dtype=jnp.bfloat16)
        qkv = qkv.reshape(B, T, 3, n_heads, hd).transpose(2, 0, 3, 1, 4)
        q = qkv[0].reshape(B * n_heads, T, hd)
        k = qkv[1].reshape(B * n_heads, T, hd)
        v = qkv[2].reshape(B * n_heads, T, hd)
        a = pl_causal_attention(q, k, v)                      # bf16
        a = a.reshape(B, n_heads, T, hd).transpose(0, 2, 1, 3).reshape(B * T, E)
        x = x + pl_linear(a, blk["w_proj"], blk["b_proj"])    # f32 residual add

        # LN2 applied once (bf16) -> MLP up-projection (+gelu) in bf16.
        xn2 = pl_layernorm(x, blk["ln2_g"], blk["ln2_b"])
        h = pl_linear(xn2, blk["w_fc"], blk["b_fc"], act="gelu",
                      out_dtype=jnp.bfloat16)
        x = x + pl_linear(h, blk["w_mlp_proj"], blk["b_mlp_proj"])

    # Final LN applied once; LM head fuses matmul + online-LSE cross-entropy,
    # emitting bf16 logits and f32 per-row loss.
    if targets is not None:
        tgt_full = jnp.concatenate(
            [targets, jnp.zeros((B, 1), jnp.int32)], axis=1).reshape(-1)
    else:
        tgt_full = jnp.zeros((B * T,), jnp.int32)

    xn_f = pl_layernorm(x, gparams["lnf_g"], gparams["lnf_b"])
    logits_flat, loss_rows = pl_head_ce(
        xn_f, gparams["head_w"], gparams["head_b"], tgt_full)
    V = logits_flat.shape[-1]
    logits = logits_flat.reshape(B, T, V)

    loss_text = None
    loss_image = None
    if targets is not None:
        lr = loss_rows.reshape(B, T)
        loss_text = jnp.mean(lr[:, :Lt - 1])           # positions predicting text[:,1:]
        loss_image = jnp.mean(lr[:, Lt - 1:T - 1])     # positions predicting image toks
    return logits, loss_text, loss_image


def dalle_forward(params, im, text, *, num_words, patch, n_heads, training=True):
    image_tokens = vae_get_codebook_indices(params["vae"], im, patch).reshape(im.shape[0], -1)
    target_image_tokens = image_tokens + num_words
    labels = None
    if training:
        labels = jnp.concatenate([text[:, 1:], target_image_tokens], axis=1)
    return gpt_forward(params["gpt"], image_tokens, text, labels, n_heads=n_heads)


# --------------------------------------------------------------------- main --

if __name__ == "__main__":
    B, C, H, W = 2, 3, 16, 16
    image_size = 4                     # VQ token grid side -> 16 image tokens
    patch = H // image_size
    num_words = 32                     # text vocab
    image_vocab_size = 16              # codebook size
    max_text_len = 8
    n_embd, n_heads, n_layers = 32, 2, 2
    codebook_dim = 16

    key = jax.random.PRNGKey(0)
    kp, ki, kt = jax.random.split(key, 3)
    params = init_dalle_params(
        kp, in_channels=C, patch=patch, codebook_dim=codebook_dim,
        image_vocab_size=image_vocab_size, num_words=num_words,
        max_text_len=max_text_len, image_size=image_size,
        n_embd=n_embd, n_layers=n_layers)

    im = jax.random.normal(ki, (B, C, H, W), jnp.float32)
    text = jax.random.randint(kt, (B, max_text_len), 0, num_words, jnp.int32)

    logits, loss_text, loss_image = dalle_forward(
        params, im, text, num_words=num_words, patch=patch,
        n_heads=n_heads, training=True)
    jax.block_until_ready((logits, loss_text, loss_image))

    T = max_text_len + image_size * image_size
    assert logits.shape == (B, T, num_words + image_vocab_size)
    assert loss_text.shape == () and loss_image.shape == ()
    assert bool(jnp.isfinite(loss_text)) and bool(jnp.isfinite(loss_image))
    print("KERNEL_OK")
</pallas_src>

<mosaic_0001>
module attributes {stable_mosaic.version = 11 : i64} {
  func.func @_linear_kernel(%arg0: i32, %arg1: i32, %arg2: i32, %arg3: memref<32x128xbf16, #tpu.memory_space<vmem>>, %arg4: memref<128x128xbf16, #tpu.memory_space<vmem>>, %arg5: memref<1x128xf32, #tpu.memory_space<vmem>>, %arg6: memref<32x128xbf16, #tpu.memory_space<vmem>>, %arg7: memref<32x128xf32, #tpu.memory_space<vmem>>) attributes {dimension_semantics = [#tpu.dimension_semantics<parallel>, #tpu.dimension_semantics<parallel>, #tpu.dimension_semantics<arbitrary>], iteration_bounds = array<i64: 1, 1, 1>, scalar_prefetch = 0 : i64, scratch_operands = 1 : i64, tpu.core_type = #tpu.core_type<tc>, window_params = [{transform_indices = @transform_0, window_bounds = array<i64: 32, 128>}, {transform_indices = @transform_1, window_bounds = array<i64: 128, 128>}, {transform_indices = @transform_2, window_bounds = array<i64: 1, 128>}, {transform_indices = @transform_3, window_bounds = array<i64: 32, 128>}]} {
    %c0_i32 = arith.constant 0 : i32
    %0 = arith.cmpi eq, %arg2, %c0_i32 : i32
    %1 = arith.extui %0 : i1 to i32
    %c0_i32_0 = arith.constant 0 : i32
    %2 = arith.cmpi ne, %1, %c0_i32_0 : i32
    scf.if %2 {
      %cst_10 = arith.constant 0.000000e+00 : f32
      %12 = vector.broadcast %cst_10 : f32 to vector<32x128xf32>
      %c0_11 = arith.constant 0 : index
      %c0_12 = arith.constant 0 : index
      %13 = vector.load %arg7[%c0_11, %c0_12] : memref<32x128xf32, #tpu.memory_space<vmem>>, vector<32x128xf32>
      tpu.vector_store %arg7[%c0_11, %c0_12], %12 {strides = array<i32>} : memref<32x128xf32, #tpu.memory_space<vmem>>, vector<32x128xf32>,
    } else {
    }
    %c0 = arith.constant 0 : index
    %c0_1 = arith.constant 0 : index
    %3 = vector.load %arg7[%c0, %c0_1] : memref<32x128xf32, #tpu.memory_space<vmem>>, vector<32x128xf32>
    %c0_2 = arith.constant 0 : index
    %c0_3 = arith.constant 0 : index
    %4 = vector.load %arg3[%c0_2, %c0_3] : memref<32x128xbf16, #tpu.memory_space<vmem>>, vector<32x128xbf16>
    %c0_4 = arith.constant 0 : index
    %c0_5 = arith.constant 0 : index
    %5 = vector.load %arg4[%c0_4, %c0_5] : memref<128x128xbf16, #tpu.memory_space<vmem>>, vector<128x128xbf16>
    %cst = arith.constant dense<0.000000e+00> : vector<32x128xf32>
    %6 = tpu.matmul %4, %5, %cst {dimension_numbers = #tpu.dot_dimension_numbers<[1], [0], [0], [1], [0, 0, 1, 1], [], []>} : vector<32x128xbf16>, vector<128x128xbf16>, vector<32x128xf32> -> vector<32x128xf32>
    %7 = arith.addf %3, %6 : vector<32x128xf32>
    %c0_6 = arith.constant 0 : index
    %c0_7 = arith.constant 0 : index
    %8 = vector.load %arg7[%c0_6, %c0_7] : memref<32x128xf32, #tpu.memory_space<vmem>>, vector<32x128xf32>
    tpu.vector_store %arg7[%c0_6, %c0_7], %7 {strides = array<i32>} : memref<32x128xf32, #tpu.memory_space<vmem>>, vector<32x128xf32>,
    %c0_i32_8 = arith.constant 0 : i32
    %9 = arith.cmpi eq, %arg2, %c0_i32_8 : i32
    %10 = arith.extui %9 : i1 to i32
    %c0_i32_9 = arith.constant 0 : i32
    %11 = arith.cmpi ne, %10, %c0_i32_9 : i32
    scf.if %11 {
      %c0_10 = arith.constant 0 : index
      %c0_11 = arith.constant 0 : index
      %12 = vector.load %arg7[%c0_10, %c0_11] : memref<32x128xf32, #tpu.memory_space<vmem>>, vector<32x128xf32>
      %c0_12 = arith.constant 0 : index
      %c0_13 = arith.constant 0 : index
      %13 = vector.load %arg5[%c0_12, %c0_13] : memref<1x128xf32, #tpu.memory_space<vmem>>, vector<1x128xf32>
      %14 = vector.broadcast %13 : vector<1x128xf32> to vector<32x128xf32>
      %15 = arith.addf %12, %14 : vector<32x128xf32>
      %16 = arith.truncf %15 : vector<32x128xf32> to vector<32x128xbf16>
      %c0_14 = arith.constant 0 : index
      %c0_15 = arith.constant 0 : index
      %17 = vector.load %arg6[%c0_14, %c0_15] : memref<32x128xbf16, #tpu.memory_space<vmem>>, vector<32x128xbf16>
      tpu.vector_store %arg6[%c0_14, %c0_15], %16 {strides = array<i32>} : memref<32x128xbf16, #tpu.memory_space<vmem>>, vector<32x128xbf16>,
    } else {
    }
    return
  }
  func.func @transform_0(%arg0: i32, %arg1: i32, %arg2: i32) -> (i32, i32) {
    %c0_i32 = arith.constant 0 : i32
    return %arg0, %arg2 : i32, i32
  }
  func.func @transform_1(%arg0: i32, %arg1: i32, %arg2: i32) -> (i32, i32) {
    %c0_i32 = arith.constant 0 : i32
    return %arg2, %arg1 : i32, i32
  }
  func.func @transform_2(%arg0: i32, %arg1: i32, %arg2: i32) -> (i32, i32) {
    %c0_i32 = arith.constant 0 : i32
    %c0_i32_0 = arith.constant 0 : i32
    return %c0_i32, %arg1 : i32, i32
  }
  func.func @transform_3(%arg0: i32, %arg1: i32, %arg2: i32) -> (i32, i32) {
    %c0_i32 = arith.constant 0 : i32
    return %arg0, %arg1 : i32, i32
  }
}

</mosaic_0001>

<llo_original>
// kernel: tpu_custom_call.1
$region0: #{tpu_custom_call.1}
  #allocation0 [shape = 'u32[]', space=smem, size = 0x4, offset = 0x4, fixed_abs, tag = 'smem constant byte address 0x4 - core index']
  #allocation1 [shape = 'u32[144,128]{1,0:T(1,128)}', space=vmem, size = 0x12000, scoped, tag = 'internal scratch']
  #allocation2 [shape = 'f32[32,128]{1,0:T(8,128)}', space=vmem, size = 0x4000, scoped, tag = 'scratch operand']
  %s0 = inlined_call_operand.hbm [shape: bf16[32,128], index: 0, kind: input, shape index: {}]
  %s1 = inlined_call_operand.hbm [shape: bf16[128,128], index: 1, kind: input, shape index: {}]
  %s2 = inlined_call_operand.vmem [shape: f32[1,128], index: 2, kind: input, shape index: {}]
  %s3 = inlined_call_operand.hbm [shape: bf16[32,128], index: 3, kind: output, shape index: {}]
  %s4 = sld [smem:[#allocation0]]
  $region38: #{tpu_custom_call.1} parent=0
    _
  %s6 = ssub.s32 1, %s4
  %s7 = scalar_select 0, %s6, %s4
  $region1: #{tpu_custom_call.1} parent=0
    #allocation3 [shape = 'u8[8192]{0}', space=vmem, size = 0x2000, scoped, tag = 'input window, operand 0, single buffered']
    #allocation4 [shape = 's32[1]{0}', space=sflag, size = 0x4, scoped, tag = 'scoped memory for tpu_custom_call.1']
    #allocation5 [shape = 's32[1]{0}', space=sflag, size = 0x4, scoped, tag = 'scoped memory for tpu_custom_call.1']
    #allocation6 [shape = 'u8[32768]{0}', space=vmem, size = 0x8000, scoped, tag = 'input window, operand 1, single buffered']
    #allocation7 [shape = 's32[1]{0}', space=sflag, size = 0x4, scoped, tag = 'scoped memory for tpu_custom_call.1']
    #allocation8 [shape = 'u8[8192]{0}', space=vmem, size = 0x2000, scoped, tag = 'output window, operand 0, single buffered']
    %8 = vsyncpa [#allocation4], 0
    %9 = vsyncpa [#allocation7], 0
    %10 = vsyncpa [#allocation5], 0
    // Predicated region
    $region2: #{tpu_custom_call.1} parent=1 // pred_check
      _
    $region3: #{tpu_custom_call.1} parent=1 // pred_check_branch
      %12 = sbr.rel (0) target = $region5
    $region4: #{tpu_custom_call.1} parent=1 // pred_region
      %s14 = ssub.s32 256, 256
      %15 = vsyncadd [#allocation4], %s14
      %s16 = sshll.u32 [#allocation3], 4
      %s17 = int_to_ptr.vmem [resolvable:$true] %s16
      %22 = dma.hbm_to_vmem [thread:$0]  %s0, 256, %s17, [#allocation4], 64, 64, 4
    $region5: #{tpu_custom_call.1} parent=1 // pred_fallthru
      _
    // Predicated region
    $region6: #{tpu_custom_call.1} parent=1 // pred_check
      _
    $region7: #{tpu_custom_call.1} parent=1 // pred_check_branch
      %24 = sbr.rel (0) target = $region9
    $region8: #{tpu_custom_call.1} parent=1 // pred_region
      %s26 = ssub.s32 1024, 1024
      %27 = vsyncadd [#allocation7], %s26
      %s28 = sshll.u32 [#allocation6], 4
      %s29 = int_to_ptr.vmem [resolvable:$true] %s28
      %34 = dma.hbm_to_vmem [thread:$0]  %s1, 1024, %s29, [#allocation7], 64, 64, 4
    $region9: #{tpu_custom_call.1} parent=1 // pred_fallthru
      _
    // Predicated region
    $region10: #{tpu_custom_call.1} parent=1 // pred_check
      _
    $region11: #{tpu_custom_call.1} parent=1 // pred_check_branch
      %36 = sbr.rel (0) target = $region13
    $region12: #{tpu_custom_call.1} parent=1 // pred_region
      _
    $region13: #{tpu_custom_call.1} parent=1 // pred_fallthru
      _
    // Predicated region
    $region14: #{tpu_custom_call.1} parent=1 // pred_check
      _
    $region15: #{tpu_custom_call.1} parent=1 // pred_check_branch
      %38 = sbr.rel (0) target = $region17
    $region16: #{tpu_custom_call.1} parent=1 // pred_region
      %39 = dma.done [#allocation4], 256
    $region17: #{tpu_custom_call.1} parent=1 // pred_fallthru
      _
    // Predicated region
    $region18: #{tpu_custom_call.1} parent=1 // pred_check
      _
    $region19: #{tpu_custom_call.1} parent=1 // pred_check_branch
      %41 = sbr.rel (0) target = $region21
    $region20: #{tpu_custom_call.1} parent=1 // pred_region
      %42 = dma.done [#allocation7], 1024
    $region21: #{tpu_custom_call.1} parent=1 // pred_fallthru
      _
    %p44 = scmp.eq.s32.totalorder 0, 0
    // Predicated region
    $region22: #{tpu_custom_call.1} parent=1 // pred_check
      %p45 = pneg %p44
    $region23: #{tpu_custom_call.1} parent=1 // pred_check_branch
      %47 = sbr.rel (%p45) target = $region25
    $region24: #{tpu_custom_call.1} parent=1 // pred_region
      %48 = vst [vmem:[#allocation2] sm:$0xff] 0.0
      %49 = vst [vmem:[#allocation2 + $0x8] sm:$0xff] 0.0
      %50 = vst [vmem:[#allocation2 + $0x10] sm:$0xff] 0.0
      %51 = vst [vmem:[#allocation2 + $0x18] sm:$0xff] 0.0
    $region25: #{tpu_custom_call.1} parent=1 // pred_fallthru
      _
    %v52 = vld [vmem:[#allocation2] sm:$0xff]
    %v53 = vld [vmem:[#allocation2 + $0x8] sm:$0xff]
    %v54 = vld [vmem:[#allocation2 + $0x10] sm:$0xff]
    %v55 = vld [vmem:[#allocation2 + $0x18] sm:$0xff]
    %v56 = vld [vmem:[#allocation3] sm:$0xf]
    %v57 = vld [vmem:[#allocation3 + $0x4] sm:$0xf]
    %v58 = vld [vmem:[#allocation3 + $0x8] sm:$0xf]
    %v59 = vld [vmem:[#allocation3 + $0xc] sm:$0xf]
    %v60 = vld [vmem:[#allocation6] sm:$0xf]
    %v61 = vld [vmem:[#allocation6 + $0x4] sm:$0xf]
    %v62 = vld [vmem:[#allocation6 + $0x8] sm:$0xf]
    %v63 = vld [vmem:[#allocation6 + $0xc] sm:$0xf]
    %v64 = vld [vmem:[#allocation6 + $0x10] sm:$0xf]
    %v65 = vld [vmem:[#allocation6 + $0x14] sm:$0xf]
    %v66 = vld [vmem:[#allocation6 + $0x18] sm:$0xf]
    %v67 = vld [vmem:[#allocation6 + $0x1c] sm:$0xf]
    %v68 = vld [vmem:[#allocation6 + $0x20] sm:$0xf]
    %v69 = vld [vmem:[#allocation6 + $0x24] sm:$0xf]
    %v70 = vld [vmem:[#allocation6 + $0x28] sm:$0xf]
    %v71 = vld [vmem:[#allocation6 + $0x2c] sm:$0xf]
    %v72 = vld [vmem:[#allocation6 + $0x30] sm:$0xf]
    %v73 = vld [vmem:[#allocation6 + $0x34] sm:$0xf]
    %v74 = vld [vmem:[#allocation6 + $0x38] sm:$0xf]
    %v75 = vld [vmem:[#allocation6 + $0x3c] sm:$0xf]
    %v80 = vunpack.c.l.b16 %v56
    %v81 = vunpack.c.l.b16 %v57
    %v82 = vunpack.c.l.b16 %v58
    %v83 = vunpack.c.l.b16 %v59
    %v84 = vpack.c.b16 %v81, %v80
    %v85 = vpack.c.b16 %v83, %v82
    %v104 = vunpack.c.l.b16 %v60
    %v105 = vunpack.c.l.b16 %v61
    %v106 = vunpack.c.l.b16 %v62
    %v107 = vunpack.c.l.b16 %v63
    %v108 = vunpack.c.l.b16 %v64
    %v109 = vunpack.c.l.b16 %v65
    %v110 = vunpack.c.l.b16 %v66
    %v111 = vunpack.c.l.b16 %v67
    %v112 = vunpack.c.l.b16 %v68
    %v113 = vunpack.c.l.b16 %v69
    %v114 = vunpack.c.l.b16 %v70
    %v115 = vunpack.c.l.b16 %v71
    %v116 = vunpack.c.l.b16 %v72
    %v117 = vunpack.c.l.b16 %v73
    %v118 = vunpack.c.l.b16 %v74
    %v119 = vunpack.c.l.b16 %v75
    %v120 = vpack.c.b16 %v105, %v104
    %v121 = vpack.c.b16 %v107, %v106
    %v122 = vpack.c.b16 %v109, %v108
    %v123 = vpack.c.b16 %v111, %v110
    %v124 = vpack.c.b16 %v113, %v112
    %v125 = vpack.c.b16 %v115, %v114
    %v126 = vpack.c.b16 %v117, %v116
    %v127 = vpack.c.b16 %v119, %v118
    %136 = vmatprep.subr.bf16.mxu0 0
    %137 = vmatpush1.bf16.msra.mxu0 %v127
    %138 = vmatprep.subr.bf16.mxu0 0
    %139 = vmatpush1.bf16.msra.mxu0 %v126
    %140 = vmatprep.subr.bf16.mxu0 0
    %141 = vmatpush1.bf16.msra.mxu0 %v125
    %142 = vmatprep.subr.bf16.mxu0 0
    %143 = vmatpush1.bf16.msra.mxu0 %v124
    %144 = vmatprep.subr.bf16.mxu0 0
    %145 = vmatpush1.bf16.msra.mxu0 %v123
    %146 = vmatprep.subr.bf16.mxu0 0
    %147 = vmatpush1.bf16.msra.mxu0 %v122
    %148 = vmatprep.subr.bf16.mxu0 0
    %149 = vmatpush1.bf16.msra.mxu0 %v121
    %150 = vmatprep.subr.bf16.mxu0 0
    %151 = vmatpush1.bf16.msra.mxu0 %v120
    %152 = vmatprep.subr.bf16.mxu0 0
    %153 = vmatpush2.bf16.msra.mxu0 0
    %154 = vmatprep.subr.bf16.mxu0 0
    %155 = vmatpush2.bf16.msra.mxu0 0
    %156 = vmatprep.subr.bf16.mxu0 0
    %157 = vmatpush2.bf16.msra.mxu0 0
    %158 = vmatprep.subr.bf16.mxu0 0
    %159 = vmatpush2.bf16.msra.mxu0 0
    %160 = vmatprep.subr.bf16.mxu0 0
    %161 = vmatpush2.bf16.msra.mxu0 0
    %162 = vmatprep.subr.bf16.mxu0 0
    %163 = vmatpush2.bf16.msra.mxu0 0
    %164 = vmatprep.subr.bf16.mxu0 0
    %165 = vmatpush2.bf16.msra.mxu0 0
    %166 = vmatprep.subr.bf16.mxu0 0
    %167 = vmatpush2.bf16.msra.mxu0 0
    %168 = vmatprep.mubr.bf16.mxu0 0
    %169 = vmatmul.mubr.bf16.gmra.mxu0 %v84
    %v170 = vpop.f32.mrf.mxu0
    %v171 = vadd.f32 0.0, %v170
    %v172 = vpop.f32.mrf.mxu0
    %v173 = vpop.f32.mrf.mxu0
    %v174 = vadd.f32 0.0, %v173
    %v175 = vpop.f32.mrf.mxu0
    %176 = vmatprep.mubr.bf16.mxu0 0
    %177 = vmatmul.mubr.bf16.gmra.mxu0 %v85
    %v178 = vpop.f32.mrf.mxu0
    %v179 = vadd.f32 0.0, %v178
    %v180 = vpop.f32.mrf.mxu0
    %v181 = vpop.f32.mrf.mxu0
    %v182 = vadd.f32 0.0, %v181
    %v183 = vpop.f32.mrf.mxu0
    %184 = vdwg.mxu0
    %v185 = vadd.f32 %v52, %v171
    %v186 = vadd.f32 %v53, %v174
    %v187 = vadd.f32 %v54, %v179
    %v188 = vadd.f32 %v55, %v182
    %189 = vst [vmem:[#allocation2] sm:$0xff] %v185
    %190 = vst [vmem:[#allocation2 + $0x8] sm:$0xff] %v186
    %191 = vst [vmem:[#allocation2 + $0x10] sm:$0xff] %v187
    %192 = vst [vmem:[#allocation2 + $0x18] sm:$0xff] %v188
    // Predicated region
    $region26: #{tpu_custom_call.1} parent=1 // pred_check
      %p193 = pneg %p44
    $region27: #{tpu_custom_call.1} parent=1 // pred_check_branch
      %195 = sbr.rel (%p193) target = $region29
    $region28: #{tpu_custom_call.1} parent=1 // pred_region
      %v196 = vld [vmem:[#allocation2] sm:$0xff]
      %v197 = vld [vmem:[#allocation2 + $0x8] sm:$0xff]
      %v198 = vld [vmem:[#allocation2 + $0x10] sm:$0xff]
      %v199 = vld [vmem:[#allocation2 + $0x18] sm:$0xff]
      %v200 = vld [vmem:[%s2] sm:$0x1]
      %v202 = vlaneseq
      %v203 = vshrl.u32 %v202, 7
      %v204 = vsub.s32 0, %v203
      %v205 = vrot.slane %v200, %v204
      %v207 = vadd.f32 %v196, %v205
      %v208 = vadd.f32 %v197, %v205
      %v209 = vadd.f32 %v198, %v205
      %v210 = vadd.f32 %v199, %v205
      %v211 = vpack.c.bf16 %v208, %v207
      %v212 = vpack.c.bf16 %v210, %v209
      %v215 = vunpack.c.l.b16 %v211
      %v216 = vunpack.c.h.b16 %v211
      %v217 = vunpack.c.l.b16 %v212
      %v218 = vunpack.c.h.b16 %v212
      %v219 = vpack.c.b16 %v215, %v215
      %v220 = vpack.c.b16 %v216, %v216
      %v221 = vpack.c.b16 %v217, %v217
      %v222 = vpack.c.b16 %v218, %v218
      %227 = vst [vmem:[#allocation8] sm:$0xf] %v219
      %228 = vst [vmem:[#allocation8 + $0x4] sm:$0xf] %v220
      %229 = vst [vmem:[#allocation8 + $0x8] sm:$0xf] %v221
      %230 = vst [vmem:[#allocation8 + $0xc] sm:$0xf] %v222
    $region29: #{tpu_custom_call.1} parent=1 // pred_fallthru
      _
    // Predicated region
    $region30: #{tpu_custom_call.1} parent=1 // pred_check
      _
    $region31: #{tpu_custom_call.1} parent=1 // pred_check_branch
      %232 = sbr.rel (0) target = $region33
    $region32: #{tpu_custom_call.1} parent=1 // pred_region
      %s234 = ssub.s32 256, 256
      %235 = vsyncadd [#allocation5], %s234
      %s236 = sshll.u32 [#allocation8], 4
      %s237 = int_to_ptr.vmem [resolvable:$true] %s236
      %242 = dma.vmem_to_hbm [thread:$0]  %s237, 256, %s3, [#allocation5], 64, 64, 4
    $region33: #{tpu_custom_call.1} parent=1 // pred_fallthru
      _
    // Predicated region
    $region34: #{tpu_custom_call.1} parent=1 // pred_check
      _
    $region35: #{tpu_custom_call.1} parent=1 // pred_check_branch
      %244 = sbr.rel (0) target = $region37
    $region36: #{tpu_custom_call.1} parent=1 // pred_region
      %245 = dma.done [#allocation5], 256
    $region37: #{tpu_custom_call.1} parent=1 // pred_fallthru
      _
    %246 = vsyncpa [#allocation4], 1
    %247 = vsyncpa [#allocation7], 1
    %248 = vsyncpa [#allocation5], 1

</llo_original>
